<compile_context>
chip_gen: v7x
topology: tpu7x:2x2x1
jax: 0.10.0
libtpu: 0.0.40
codegen_flags: <defaults>
</compile_context>

<pallas_src>
import functools

import jax
import jax.numpy as jnp
import numpy as np
from jax.experimental import pallas as pl
from jax.experimental.pallas import tpu as pltpu


def _round_up(x, m):
    return ((x + m - 1) // m) * m


# ---------------------------------------------------------------------------
# Kernel 1: hoisted input projection   gx = x @ W_ih^T + bias   (parallel rows)
# ---------------------------------------------------------------------------
def _proj_kernel(x_ref, w_ref, b_ref, gx_ref):
    gx_ref[...] = (
        jnp.dot(x_ref[...], w_ref[...], preferred_element_type=jnp.float32)
        + b_ref[...]
    ).astype(gx_ref.dtype)


def _input_projection(x2d, wih_p, bias_p):
    """x2d: (R, D) f32, wih_p: (D, G) f32, bias_p: (1, G) f32 -> (R, G) f32."""
    R, D = x2d.shape
    G = wih_p.shape[1]
    TR = min(256, _round_up(R, 8))
    R_pad = _round_up(R, TR)
    if R_pad != R:
        x2d = jnp.pad(x2d, ((0, R_pad - R), (0, 0)))

    flops = 2 * R_pad * D * G
    bytes_accessed = 4 * (R_pad * D + D * G + G + R_pad * G)

    gx = pl.pallas_call(
        _proj_kernel,
        out_shape=jax.ShapeDtypeStruct((R_pad, G), jnp.float32),
        grid_spec=pltpu.PrefetchScalarGridSpec(
            num_scalar_prefetch=0,
            grid=(R_pad // TR,),
            in_specs=[
                pl.BlockSpec((TR, D), lambda i: (i, 0)),   # x rows
                pl.BlockSpec((D, G), lambda i: (0, 0)),    # W_ih^T (resident)
                pl.BlockSpec((1, G), lambda i: (0, 0)),    # bias   (resident)
            ],
            out_specs=pl.BlockSpec((TR, G), lambda i: (i, 0)),
        ),
        compiler_params=pltpu.CompilerParams(
            dimension_semantics=("parallel",)),
        cost_estimate=pl.CostEstimate(
            flops=flops, transcendentals=0, bytes_accessed=bytes_accessed),
    )(x2d, wih_p, bias_p)
    return gx[:R]


# ---------------------------------------------------------------------------
# Kernel 2: sequential LSTM recurrence, K time steps per grid iteration
# ---------------------------------------------------------------------------
def _lstm_chunk_kernel(gx_ref, m_ref, h0_ref, c0_ref, whh_ref,
                       y_ref, hT_ref, cT_ref, h_st, c_st,
                       *, hidden_pad, chunk, seq_len, guard_tail):
    Hp = hidden_pad
    c_idx = pl.program_id(0)

    @pl.when(c_idx == 0)
    def _():
        h_st[...] = h0_ref[...].astype(jnp.float32)
        c_st[...] = c0_ref[...].astype(jnp.float32)

    # Carry state in vregs across the unrolled inner loop (no per-step VMEM
    # scratch stores); only a single store per chunk back to scratch.
    h = h_st[...]
    c = c_st[...]
    # Hoist the resident recurrent weight load out of the unrolled loop.
    whh = whh_ref[...]

    for k in range(chunk):                               # fully unrolled, static k
        m = m_ref[k]                                     # (N, 1)
        h_m = h * m                                      # masked hidden state
        c_m = c * m                                      # masked cell state
        # Only the recurrent projection stays on the serial path: one MXU push.
        gates = gx_ref[k] + jnp.dot(h_m, whh,
                                    preferred_element_type=jnp.float32)  # (N, 4Hp)
        # Gate slices are whole 128-lane tiles (Hp is a multiple of 128).
        i_g = jax.nn.sigmoid(gates[:, 0 * Hp:1 * Hp])
        f_g = jax.nn.sigmoid(gates[:, 1 * Hp:2 * Hp])
        g_g = jnp.tanh(gates[:, 2 * Hp:3 * Hp])
        o_g = jax.nn.sigmoid(gates[:, 3 * Hp:4 * Hp])
        c_new = f_g * c_m + i_g * g_g
        h_new = o_g * jnp.tanh(c_new)
        if guard_tail:
            # Time-padded tail steps must not advance the state.
            valid = (c_idx * chunk + k) < seq_len
            h_new = jnp.where(valid, h_new, h)
            c_new = jnp.where(valid, c_new, c)
        y_ref[k] = h_new.astype(y_ref.dtype)             # lane-dense (N, Hp) store
        h, c = h_new, c_new

    h_st[...] = h
    c_st[...] = c

    # Final-state outputs are resident; write them once, on the last chunk only.
    @pl.when(c_idx == pl.num_programs(0) - 1)
    def _():
        hT_ref[...] = h.astype(hT_ref.dtype)
        cT_ref[...] = c.astype(cT_ref.dtype)


def lstm_pallas(xs, ms, h0, c0, wih_t, whh_t, bias, *, chunk=8):
    """xs: (T, N, D), ms: (T, N, 1), h0/c0: (N, H), wih_t: (D, 4H),
    whh_t: (H, 4H), bias: (1, 4H). Returns y: (T, N, H), hT, cT: (N, H)."""
    T, N, D = xs.shape
    H = h0.shape[1]
    dtype = xs.dtype

    Hp = _round_up(H, 128)            # lane-aligned hidden size
    G = 4 * Hp
    K = min(chunk, T)                 # time steps per grid iteration
    T_pad = _round_up(T, K)
    guard_tail = (T_pad != T)

    # --- re-layout weights so each gate occupies whole 128-lane tiles -------
    def pad_gate_cols(w):
        parts = [jnp.pad(w[..., g * H:(g + 1) * H], ((0, 0), (0, Hp - H)))
                 for g in range(4)]
        return jnp.concatenate(parts, axis=-1)

    wih_p = pad_gate_cols(wih_t.astype(jnp.float32))                    # (D, G)
    whh_p = jnp.pad(pad_gate_cols(whh_t.astype(jnp.float32)),
                    ((0, Hp - H), (0, 0)))                              # (Hp, G)
    bias_p = pad_gate_cols(bias.astype(jnp.float32))                    # (1, G)
    h0_p = jnp.pad(h0.astype(jnp.float32), ((0, 0), (0, Hp - H)))       # (N, Hp)
    c0_p = jnp.pad(c0.astype(jnp.float32), ((0, 0), (0, Hp - H)))       # (N, Hp)

    # --- time padding to a multiple of the chunk size ------------------------
    if guard_tail:
        xs = jnp.pad(xs, ((0, T_pad - T), (0, 0), (0, 0)))
        ms = jnp.pad(ms, ((0, T_pad - T), (0, 0), (0, 0)))

    # --- hoisted input projection: one big parallel matmul -------------------
    gx = _input_projection(xs.reshape(T_pad * N, D).astype(jnp.float32),
                           wih_p, bias_p)
    gx = gx.reshape(T_pad, N, G)

    n_chunks = T_pad // K
    kernel = functools.partial(_lstm_chunk_kernel, hidden_pad=Hp, chunk=K,
                               seq_len=T, guard_tail=guard_tail)

    flops = 2 * T_pad * N * Hp * G + 12 * T_pad * N * Hp
    transcendentals = 5 * T_pad * N * Hp
    bytes_accessed = 4 * (T_pad * N * (G + 1 + Hp) + Hp * G + 4 * N * Hp)

    grid_spec = pltpu.PrefetchScalarGridSpec(
        num_scalar_prefetch=0,
        grid=(n_chunks,),
        in_specs=[
            pl.BlockSpec((K, N, G), lambda c: (c, 0, 0)),    # precomputed gx chunk
            pl.BlockSpec((K, N, 1), lambda c: (c, 0, 0)),    # mask chunk
            pl.BlockSpec((N, Hp), lambda c: (0, 0)),         # h0 (resident)
            pl.BlockSpec((N, Hp), lambda c: (0, 0)),         # c0 (resident)
            pl.BlockSpec((Hp, G), lambda c: (0, 0)),         # W_hh^T (resident)
        ],
        out_specs=(
            pl.BlockSpec((K, N, Hp), lambda c: (c, 0, 0)),   # y chunk (lane dense)
            pl.BlockSpec((N, Hp), lambda c: (0, 0)),         # h_T (resident)
            pl.BlockSpec((N, Hp), lambda c: (0, 0)),         # c_T (resident)
        ),
        scratch_shapes=[
            pltpu.VMEM((N, Hp), jnp.float32),                # h state carry
            pltpu.VMEM((N, Hp), jnp.float32),                # c state carry
        ],
    )

    y, hT, cT = pl.pallas_call(
        kernel,
        out_shape=(
            jax.ShapeDtypeStruct((T_pad, N, Hp), dtype),
            jax.ShapeDtypeStruct((N, Hp), dtype),
            jax.ShapeDtypeStruct((N, Hp), dtype),
        ),
        grid_spec=grid_spec,
        compiler_params=pltpu.CompilerParams(
            dimension_semantics=("arbitrary",),              # time carries state
            vmem_limit_bytes=32 * 1024 * 1024),
        cost_estimate=pl.CostEstimate(
            flops=flops, transcendentals=transcendentals,
            bytes_accessed=bytes_accessed),
    )(gx, ms.astype(jnp.float32), h0_p, c0_p, whh_p)

    return y[:T, :, :H], hT[:, :H], cT[:, :H]


def rnn_forward(x, hxs, masks, params):
    """Mirrors RNN.forward for arch='lstm'.

    x:     (B, D) with B == N (single step) or B == T*N (sequence)
    hxs:   tuple (h, c), each (N, H)
    masks: (B, 1) float {0., 1.}
    Returns (x_out (B, H), (h, c) each (N, H)).
    """
    wih_t, whh_t, bias = params
    h0, c0 = hxs
    N, H = h0.shape
    B, D = x.shape
    T = B // N
    xs = x.reshape(T, N, D)
    ms = masks.reshape(T, N, 1).astype(x.dtype)
    y, hT, cT = lstm_pallas(xs, ms, h0, c0, wih_t, whh_t, bias)
    return y.reshape(T * N, H), (hT, cT)


def rnn_reference(x, hxs, masks, params):
    """Pure-JAX reference with identical semantics (for verification)."""
    wih_t, whh_t, bias = params
    h, c = hxs
    N, H = h.shape
    B, D = x.shape
    T = B // N
    xs = x.reshape(T, N, D)
    ms = masks.reshape(T, N, 1).astype(x.dtype)
    ys = []
    for t in range(T):
        hm = h * ms[t]
        cm = c * ms[t]
        g = xs[t] @ wih_t + hm @ whh_t + bias
        i_g = jax.nn.sigmoid(g[:, 0 * H:1 * H])
        f_g = jax.nn.sigmoid(g[:, 1 * H:2 * H])
        g_g = jnp.tanh(g[:, 2 * H:3 * H])
        o_g = jax.nn.sigmoid(g[:, 3 * H:4 * H])
        c = f_g * cm + i_g * g_g
        h = o_g * jnp.tanh(c)
        ys.append(h)
    return jnp.concatenate(ys, axis=0), (h, c)


def init_params(key, input_size, hidden_size, dtype=jnp.float32):
    """nn.LSTM params with orthogonal weights and zero biases (as in __init__)."""
    k1, k2 = jax.random.split(key)
    orth = jax.nn.initializers.orthogonal()
    w_ih = orth(k1, (4 * hidden_size, input_size), dtype)   # torch weight_ih_l0
    w_hh = orth(k2, (4 * hidden_size, hidden_size), dtype)  # torch weight_hh_l0
    bias = jnp.zeros((1, 4 * hidden_size), dtype)           # b_ih + b_hh == 0
    # store transposed for direct (x @ W^T) MXU use inside the kernels
    return (w_ih.T, w_hh.T, bias)


if __name__ == "__main__":
    input_size = 16
    hidden_size = 32
    N = 2          # batch of environments
    T = 8          # rollout length

    key = jax.random.PRNGKey(0)
    kp, kx, kh, kc, km, kx1, km1 = jax.random.split(key, 7)

    params = init_params(kp, input_size, hidden_size)

    # --- sequence branch: x is (T*N, D), masks reset state mid-rollout ---
    x_seq = jax.random.normal(kx, (T * N, input_size), jnp.float32)
    h0 = jax.random.normal(kh, (N, hidden_size), jnp.float32)
    c0 = jax.random.normal(kc, (N, hidden_size), jnp.float32)
    masks_seq = (jax.random.uniform(km, (T * N, 1)) > 0.25).astype(jnp.float32)

    y_seq, (hT, cT) = rnn_forward(x_seq, (h0, c0), masks_seq, params)
    jax.block_until_ready((y_seq, hT, cT))

    y_ref, (hT_ref, cT_ref) = rnn_reference(x_seq, (h0, c0), masks_seq, params)
    np.testing.assert_allclose(np.asarray(y_seq), np.asarray(y_ref), rtol=1e-5, atol=1e-5)
    np.testing.assert_allclose(np.asarray(hT), np.asarray(hT_ref), rtol=1e-5, atol=1e-5)
    np.testing.assert_allclose(np.asarray(cT), np.asarray(cT_ref), rtol=1e-5, atol=1e-5)

    # --- single-step branch: x is (N, D) ---
    x_one = jax.random.normal(kx1, (N, input_size), jnp.float32)
    masks_one = (jax.random.uniform(km1, (N, 1)) > 0.5).astype(jnp.float32)
    y_one, (h1, c1) = rnn_forward(x_one, (h0, c0), masks_one, params)
    jax.block_until_ready((y_one, h1, c1))

    y1_ref, (h1_ref, c1_ref) = rnn_reference(x_one, (h0, c0), masks_one, params)
    np.testing.assert_allclose(np.asarray(y_one), np.asarray(y1_ref), rtol=1e-5, atol=1e-5)
    np.testing.assert_allclose(np.asarray(h1), np.asarray(h1_ref), rtol=1e-5, atol=1e-5)
    np.testing.assert_allclose(np.asarray(c1), np.asarray(c1_ref), rtol=1e-5, atol=1e-5)

    print("KERNEL_OK")
</pallas_src>

<mosaic_0001>
module attributes {stable_mosaic.version = 11 : i64} {
  func.func @_proj_kernel(%arg0: i32, %arg1: memref<16x16xf32, #tpu.memory_space<vmem>>, %arg2: memref<16x512xf32, #tpu.memory_space<vmem>>, %arg3: memref<1x512xf32, #tpu.memory_space<vmem>>, %arg4: memref<16x512xf32, #tpu.memory_space<vmem>>) attributes {dimension_semantics = [#tpu.dimension_semantics<parallel>], iteration_bounds = array<i64: 1>, scalar_prefetch = 0 : i64, scratch_operands = 0 : i64, tpu.core_type = #tpu.core_type<tc>, window_params = [{transform_indices = @transform_0, window_bounds = array<i64: 16, 16>}, {pipeline_mode = #tpu.pipeline_mode<synchronous>, transform_indices = @transform_1, window_bounds = array<i64: 16, 512>}, {pipeline_mode = #tpu.pipeline_mode<synchronous>, transform_indices = @transform_2, window_bounds = array<i64: 1, 512>}, {transform_indices = @transform_3, window_bounds = array<i64: 16, 512>}]} {
    %c0 = arith.constant 0 : index
    %c0_0 = arith.constant 0 : index
    %0 = vector.load %arg1[%c0, %c0_0] : memref<16x16xf32, #tpu.memory_space<vmem>>, vector<16x16xf32>
    %c0_1 = arith.constant 0 : index
    %c0_2 = arith.constant 0 : index
    %1 = vector.load %arg2[%c0_1, %c0_2] : memref<16x512xf32, #tpu.memory_space<vmem>>, vector<16x512xf32>
    %cst = arith.constant dense<0.000000e+00> : vector<16x512xf32>
    %2 = tpu.matmul %0, %1, %cst {dimension_numbers = #tpu.dot_dimension_numbers<[1], [0], [0], [1], [0, 0, 1, 1], [], []>} : vector<16x16xf32>, vector<16x512xf32>, vector<16x512xf32> -> vector<16x512xf32>
    %c0_3 = arith.constant 0 : index
    %c0_4 = arith.constant 0 : index
    %3 = vector.load %arg3[%c0_3, %c0_4] : memref<1x512xf32, #tpu.memory_space<vmem>>, vector<1x512xf32>
    %4 = vector.broadcast %3 : vector<1x512xf32> to vector<16x512xf32>
    %5 = arith.addf %2, %4 : vector<16x512xf32>
    %c0_5 = arith.constant 0 : index
    %c0_6 = arith.constant 0 : index
    %6 = vector.load %arg4[%c0_5, %c0_6] : memref<16x512xf32, #tpu.memory_space<vmem>>, vector<16x512xf32>
    tpu.vector_store %arg4[%c0_5, %c0_6], %5 {strides = array<i32>} : memref<16x512xf32, #tpu.memory_space<vmem>>, vector<16x512xf32>,
    return
  }
  func.func @transform_0(%arg0: i32) -> (i32, i32) {
    %c0_i32 = arith.constant 0 : i32
    %c0_i32_0 = arith.constant 0 : i32
    return %arg0, %c0_i32 : i32, i32
  }
  func.func @transform_1(%arg0: i32) -> (i32, i32) {
    %c0_i32 = arith.constant 0 : i32
    %c0_i32_0 = arith.constant 0 : i32
    %c0_i32_1 = arith.constant 0 : i32
    return %c0_i32, %c0_i32_0 : i32, i32
  }
  func.func @transform_2(%arg0: i32) -> (i32, i32) {
    %c0_i32 = arith.constant 0 : i32
    %c0_i32_0 = arith.constant 0 : i32
    %c0_i32_1 = arith.constant 0 : i32
    return %c0_i32, %c0_i32_0 : i32, i32
  }
  func.func @transform_3(%arg0: i32) -> (i32, i32) {
    %c0_i32 = arith.constant 0 : i32
    %c0_i32_0 = arith.constant 0 : i32
    return %arg0, %c0_i32 : i32, i32
  }
}

</mosaic_0001>

<llo_original>
// kernel: tpu_custom_call.1
$region0: #{tpu_custom_call.1}
  #allocation0 [shape = 'u32[]', space=smem, size = 0x4, offset = 0x4, fixed_abs, tag = 'smem constant byte address 0x4 - core index']
  #allocation1 [shape = 'u32[144,128]{1,0:T(1,128)}', space=vmem, size = 0x12000, scoped, tag = 'internal scratch']
  %s0 = inlined_call_operand.hbm [shape: f32[16,16], index: 0, kind: input, shape index: {}]
  %s1 = inlined_call_operand.hbm [shape: f32[16,512], index: 1, kind: input, shape index: {}]
  %s2 = inlined_call_operand.vmem [shape: f32[1,512], index: 2, kind: input, shape index: {}]
  %s3 = inlined_call_operand.hbm [shape: f32[16,512], index: 3, kind: output, shape index: {}]
  %s4 = sld [smem:[#allocation0]]
  $region30: #{tpu_custom_call.1} parent=0
    _
  %s6 = ssub.s32 1, %s4
  %s7 = scalar_select 0, %s6, %s4
  $region1: #{tpu_custom_call.1} parent=0
    #allocation2 [shape = 'u8[8192]{0}', space=vmem, size = 0x2000, scoped, tag = 'input window, operand 0, single buffered']
    #allocation3 [shape = 's32[1]{0}', space=sflag, size = 0x4, scoped, tag = 'scoped memory for tpu_custom_call.1']
    #allocation4 [shape = 's32[1]{0}', space=sflag, size = 0x4, scoped, tag = 'scoped memory for tpu_custom_call.1']
    #allocation5 [shape = 'u8[32768]{0}', space=vmem, size = 0x8000, scoped, tag = 'input window, operand 1, single buffered']
    #allocation6 [shape = 's32[1]{0}', space=sflag, size = 0x4, scoped, tag = 'scoped memory for tpu_custom_call.1']
    #allocation7 [shape = 'u8[32768]{0}', space=vmem, size = 0x8000, scoped, tag = 'output window, operand 0, single buffered']
    %8 = vsyncpa [#allocation3], 0
    %9 = vsyncpa [#allocation6], 0
    %10 = vsyncpa [#allocation4], 0
    // Predicated region
    $region2: #{tpu_custom_call.1} parent=1 // pred_check
      _
    $region3: #{tpu_custom_call.1} parent=1 // pred_check_branch
      %12 = sbr.rel (0) target = $region5
    $region4: #{tpu_custom_call.1} parent=1 // pred_region
      %s14 = ssub.s32 256, 256
      %15 = vsyncadd [#allocation3], %s14
      %s16 = sshll.u32 [#allocation2], 4
      %s17 = int_to_ptr.vmem [resolvable:$true] %s16
      %22 = dma.hbm_to_vmem [thread:$0]  %s0, 256, %s17, [#allocation3], 128, 128, 8
    $region5: #{tpu_custom_call.1} parent=1 // pred_fallthru
      _
    // Predicated region
    $region6: #{tpu_custom_call.1} parent=1 // pred_check
      _
    $region7: #{tpu_custom_call.1} parent=1 // pred_check_branch
      %24 = sbr.rel (0) target = $region9
    $region8: #{tpu_custom_call.1} parent=1 // pred_region
      %s26 = ssub.s32 1024, 1024
      %27 = vsyncadd [#allocation6], %s26
      %s28 = sshll.u32 [#allocation5], 4
      %s29 = int_to_ptr.vmem [resolvable:$true] %s28
      %34 = dma.hbm_to_vmem [thread:$0]  %s1, 1024, %s29, [#allocation6], 512, 512, 32
    $region9: #{tpu_custom_call.1} parent=1 // pred_fallthru
      _
    // Predicated region
    $region10: #{tpu_custom_call.1} parent=1 // pred_check
      _
    $region11: #{tpu_custom_call.1} parent=1 // pred_check_branch
      %36 = sbr.rel (0) target = $region13
    $region12: #{tpu_custom_call.1} parent=1 // pred_region
      _
    $region13: #{tpu_custom_call.1} parent=1 // pred_fallthru
      _
    // Predicated region
    $region14: #{tpu_custom_call.1} parent=1 // pred_check
      _
    $region15: #{tpu_custom_call.1} parent=1 // pred_check_branch
      %38 = sbr.rel (0) target = $region17
    $region16: #{tpu_custom_call.1} parent=1 // pred_region
      %39 = dma.done [#allocation3], 256
    $region17: #{tpu_custom_call.1} parent=1 // pred_fallthru
      _
    // Predicated region
    $region18: #{tpu_custom_call.1} parent=1 // pred_check
      _
    $region19: #{tpu_custom_call.1} parent=1 // pred_check_branch
      %41 = sbr.rel (0) target = $region21
    $region20: #{tpu_custom_call.1} parent=1 // pred_region
      %42 = dma.done [#allocation6], 1024
    $region21: #{tpu_custom_call.1} parent=1 // pred_fallthru
      _
    %v43 = vld [vmem:[#allocation2] sm:$0xff]
    %v44 = vld [vmem:[#allocation2 + $0x8] sm:$0xff]
    %v45 = vld [vmem:[#allocation5] sm:$0xff]
    %v46 = vld [vmem:[#allocation5 + $0x8] sm:$0xff]
    %v47 = vld [vmem:[#allocation5 + $0x10] sm:$0xff]
    %v48 = vld [vmem:[#allocation5 + $0x18] sm:$0xff]
    %v49 = vld [vmem:[#allocation5 + $0x20] sm:$0xff]
    %v50 = vld [vmem:[#allocation5 + $0x28] sm:$0xff]
    %v51 = vld [vmem:[#allocation5 + $0x30] sm:$0xff]
    %v52 = vld [vmem:[#allocation5 + $0x38] sm:$0xff]
    %v53 = vld [vmem:[%s2] sm:$0xf]
    %v55 = vlaneseq
    %v56 = vshrl.u32 %v55, 7
    %v57 = vsub.s32 0, %v56
    %v58 = vrot.slane %v53, %v57
    %v59 = vlaneseq
    %v60 = vshrl.u32 %v59, 7
    %v61 = vsub.s32 1, %v60
    %v62 = vrot.slane %v53, %v61
    %v63 = vlaneseq
    %v64 = vshrl.u32 %v63, 7
    %v65 = vsub.s32 2, %v64
    %v66 = vrot.slane %v53, %v65
    %v67 = vlaneseq
    %v68 = vshrl.u32 %v67, 7
    %v69 = vsub.s32 3, %v68
    %v70 = vrot.slane %v53, %v69
    %vm75 = vcmask 130048
    %v77 = vsel %vm75, %v43, 0
    %v80 = vsel %vm75, %v44, 0
    %82 = vmatprep.subr.mxu0 %v46
    %83 = vmatpush1.msra.mxu0 %v45
    %84 = vmatprep.subr.mxu0 %v50
    %85 = vmatpush1.msra.mxu0 %v49
    %86 = vmatprep.subr.mxu0 0.0
    %87 = vmatpush1.msra.mxu0 0.0
    %88 = vmatprep.subr.mxu0 0.0
    %89 = vmatpush1.msra.mxu0 0.0
    %90 = vmatprep.subr.mxu0 0.0
    %91 = vmatpush1.msra.mxu0 0.0
    %92 = vmatprep.subr.mxu0 0.0
    %93 = vmatpush1.msra.mxu0 0.0
    %94 = vmatprep.subr.mxu0 0.0
    %95 = vmatpush1.msra.mxu0 0.0
    %96 = vmatprep.subr.mxu0 0.0
    %97 = vmatpush1.msra.mxu0 0.0
    %98 = vmatprep.subr.mxu0 0.0
    %99 = vmatpush1.msra.mxu0 0.0
    %100 = vmatprep.subr.mxu0 0.0
    %101 = vmatpush1.msra.mxu0 0.0
    %102 = vmatprep.subr.mxu0 0.0
    %103 = vmatpush1.msra.mxu0 0.0
    %104 = vmatprep.subr.mxu0 0.0
    %105 = vmatpush1.msra.mxu0 0.0
    %106 = vmatprep.subr.mxu0 0.0
    %107 = vmatpush1.msra.mxu0 0.0
    %108 = vmatprep.subr.mxu0 0.0
    %109 = vmatpush1.msra.mxu0 0.0
    %110 = vmatprep.subr.mxu0 0.0
    %111 = vmatpush1.msra.mxu0 0.0
    %112 = vmatprep.subr.mxu0 0.0
    %113 = vmatpush1.msra.mxu0 0.0
    %114 = vmatprep.subr.mxu0 0.0
    %115 = vmatpush1.msra.mxu0 0.0
    %116 = vmatprep.subr.mxu0 0.0
    %117 = vmatpush1.msra.mxu0 0.0
    %118 = vmatprep.subr.mxu0 0.0
    %119 = vmatpush1.msra.mxu0 0.0
    %120 = vmatprep.subr.mxu0 0.0
    %121 = vmatpush1.msra.mxu0 0.0
    %122 = vmatprep.subr.mxu0 0.0
    %123 = vmatpush1.msra.mxu0 0.0
    %124 = vmatprep.subr.mxu0 0.0
    %125 = vmatpush1.msra.mxu0 0.0
    %126 = vmatprep.subr.mxu0 0.0
    %127 = vmatpush1.msra.mxu0 0.0
    %128 = vmatprep.subr.mxu0 0.0
    %129 = vmatpush1.msra.mxu0 0.0
    %130 = vmatprep.subr.mxu0 0.0
    %131 = vmatpush1.msra.mxu0 0.0
    %132 = vmatprep.subr.mxu0 0.0
    %133 = vmatpush1.msra.mxu0 0.0
    %134 = vmatprep.subr.mxu0 0.0
    %135 = vmatpush1.msra.mxu0 0.0
    %136 = vmatprep.subr.mxu0 0.0
    %137 = vmatpush1.msra.mxu0 0.0
    %138 = vmatprep.subr.mxu0 0.0
    %139 = vmatpush1.msra.mxu0 0.0
    %140 = vmatprep.subr.mxu0 0.0
    %141 = vmatpush1.msra.mxu0 0.0
    %142 = vmatprep.subr.mxu0 0.0
    %143 = vmatpush1.msra.mxu0 0.0
    %144 = vmatprep.subr.mxu0 0.0
    %145 = vmatpush1.msra.mxu0 0.0
    %146 = vmatprep.mubr.f32.mxu0 0.0
    %147 = vmatmul.mubr.f32.gmra.mrb[0].mxu0 %v77
    %v148 = vpop.f32.mrb[0].mxu0
    %v149 = vadd.f32 %v58, %v148
    %v150 = vpop.f32.mrb[0].mxu0
    %v151 = vadd.f32 %v62, %v150
    %152 = vmatprep.mubr.f32.mxu0 0.0
    %153 = vmatmul.mubr.f32.gmra.mrb[0].mxu0 %v80
    %v154 = vpop.f32.mrb[0].mxu0
    %v155 = vadd.f32 %v58, %v154
    %v156 = vpop.f32.mrb[0].mxu0
    %v157 = vadd.f32 %v62, %v156
    %158 = vdwg.mxu0
    %159 = vmatprep.subr.mxu0 %v48
    %160 = vmatpush1.msra.mxu0 %v47
    %161 = vmatprep.subr.mxu0 %v52
    %162 = vmatpush1.msra.mxu0 %v51
    %163 = vmatprep.subr.mxu0 0.0
    %164 = vmatpush1.msra.mxu0 0.0
    %165 = vmatprep.subr.mxu0 0.0
    %166 = vmatpush1.msra.mxu0 0.0
    %167 = vmatprep.subr.mxu0 0.0
    %168 = vmatpush1.msra.mxu0 0.0
    %169 = vmatprep.subr.mxu0 0.0
    %170 = vmatpush1.msra.mxu0 0.0
    %171 = vmatprep.subr.mxu0 0.0
    %172 = vmatpush1.msra.mxu0 0.0
    %173 = vmatprep.subr.mxu0 0.0
    %174 = vmatpush1.msra.mxu0 0.0
    %175 = vmatprep.subr.mxu0 0.0
    %176 = vmatpush1.msra.mxu0 0.0
    %177 = vmatprep.subr.mxu0 0.0
    %178 = vmatpush1.msra.mxu0 0.0
    %179 = vmatprep.subr.mxu0 0.0
    %180 = vmatpush1.msra.mxu0 0.0
    %181 = vmatprep.subr.mxu0 0.0
    %182 = vmatpush1.msra.mxu0 0.0
    %183 = vmatprep.subr.mxu0 0.0
    %184 = vmatpush1.msra.mxu0 0.0
    %185 = vmatprep.subr.mxu0 0.0
    %186 = vmatpush1.msra.mxu0 0.0
    %187 = vmatprep.subr.mxu0 0.0
    %188 = vmatpush1.msra.mxu0 0.0
    %189 = vmatprep.subr.mxu0 0.0
    %190 = vmatpush1.msra.mxu0 0.0
    %191 = vmatprep.subr.mxu0 0.0
    %192 = vmatpush1.msra.mxu0 0.0
    %193 = vmatprep.subr.mxu0 0.0
    %194 = vmatpush1.msra.mxu0 0.0
    %195 = vmatprep.subr.mxu0 0.0
    %196 = vmatpush1.msra.mxu0 0.0
    %197 = vmatprep.subr.mxu0 0.0
    %198 = vmatpush1.msra.mxu0 0.0
    %199 = vmatprep.subr.mxu0 0.0
    %200 = vmatpush1.msra.mxu0 0.0
    %201 = vmatprep.subr.mxu0 0.0
    %202 = vmatpush1.msra.mxu0 0.0
    %203 = vmatprep.subr.mxu0 0.0
    %204 = vmatpush1.msra.mxu0 0.0
    %205 = vmatprep.subr.mxu0 0.0
    %206 = vmatpush1.msra.mxu0 0.0
    %207 = vmatprep.subr.mxu0 0.0
    %208 = vmatpush1.msra.mxu0 0.0
    %209 = vmatprep.subr.mxu0 0.0
    %210 = vmatpush1.msra.mxu0 0.0
    %211 = vmatprep.subr.mxu0 0.0
    %212 = vmatpush1.msra.mxu0 0.0
    %213 = vmatprep.subr.mxu0 0.0
    %214 = vmatpush1.msra.mxu0 0.0
    %215 = vmatprep.subr.mxu0 0.0
    %216 = vmatpush1.msra.mxu0 0.0
    %217 = vmatprep.subr.mxu0 0.0
    %218 = vmatpush1.msra.mxu0 0.0
    %219 = vmatprep.subr.mxu0 0.0
    %220 = vmatpush1.msra.mxu0 0.0
    %221 = vmatprep.subr.mxu0 0.0
    %222 = vmatpush1.msra.mxu0 0.0
    %223 = vmatprep.mubr.f32.mxu0 0.0
    %224 = vmatmul.mubr.f32.gmra.mrb[0].mxu0 %v77
    %v225 = vpop.f32.mrb[0].mxu0
    %v226 = vadd.f32 %v66, %v225
    %v227 = vpop.f32.mrb[0].mxu0
    %v228 = vadd.f32 %v70, %v227
    %229 = vmatprep.mubr.f32.mxu0 0.0
    %230 = vmatmul.mubr.f32.gmra.mrb[0].mxu0 %v80
    %v231 = vpop.f32.mrb[0].mxu0
    %v232 = vadd.f32 %v66, %v231
    %v233 = vpop.f32.mrb[0].mxu0
    %v234 = vadd.f32 %v70, %v233
    %235 = vdwg.mxu0
    %236 = vst [vmem:[#allocation7] sm:$0xff] %v149
    %237 = vst [vmem:[#allocation7 + $0x8] sm:$0xff] %v151
    %238 = vst [vmem:[#allocation7 + $0x10] sm:$0xff] %v226
    %239 = vst [vmem:[#allocation7 + $0x18] sm:$0xff] %v228
    %240 = vst [vmem:[#allocation7 + $0x20] sm:$0xff] %v155
    %241 = vst [vmem:[#allocation7 + $0x28] sm:$0xff] %v157
    %242 = vst [vmem:[#allocation7 + $0x30] sm:$0xff] %v232
    %243 = vst [vmem:[#allocation7 + $0x38] sm:$0xff] %v234
    // Predicated region
    $region22: #{tpu_custom_call.1} parent=1 // pred_check
      _
    $region23: #{tpu_custom_call.1} parent=1 // pred_check_branch
      %245 = sbr.rel (0) target = $region25
    $region24: #{tpu_custom_call.1} parent=1 // pred_region
      %s247 = ssub.s32 1024, 1024
      %248 = vsyncadd [#allocation4], %s247
      %s249 = sshll.u32 [#allocation7], 4
      %s250 = int_to_ptr.vmem [resolvable:$true] %s249
      %255 = dma.vmem_to_hbm [thread:$0]  %s250, 1024, %s3, [#allocation4], 512, 512, 32
    $region25: #{tpu_custom_call.1} parent=1 // pred_fallthru
      _
    // Predicated region
    $region26: #{tpu_custom_call.1} parent=1 // pred_check
      _
    $region27: #{tpu_custom_call.1} parent=1 // pred_check_branch
      %257 = sbr.rel (0) target = $region29
    $region28: #{tpu_custom_call.1} parent=1 // pred_region
      %258 = dma.done [#allocation4], 1024
    $region29: #{tpu_custom_call.1} parent=1 // pred_fallthru
      _
    %259 = vsyncpa [#allocation3], 1
    %260 = vsyncpa [#allocation6], 1
    %261 = vsyncpa [#allocation4], 1

</llo_original>
